<compile_context>
chip_gen: v6e
topology: v6e:2x2x1
jax: 0.10.0
libtpu: 0.0.40
codegen_flags: <defaults>
</compile_context>

<pallas_src>
import functools
import math

import jax
import jax.numpy as jnp
from jax.experimental import pallas as pl
from jax.experimental.pallas import tpu as pltpu


def _round_up(x, m):
    return ((x + m - 1) // m) * m


# ----------------------------- Pallas kernel --------------------------------
def fm_kernel(bias_ref, slab_ref, out_ref, *, num_fields, emb):
    """bias: (1,1) f32 in SMEM; slab: (TB, F*emb + F1) f32, lane-dense.

    slab row layout: [v_{0,0..D} v_{1,0..D} ... v_{F-1,0..D} | first_0..first_F1].
    """
    fd = num_fields * emb
    x2 = slab_ref[:, :fd]            # (TB, F*emb)  second-order factors
    xl = slab_ref[:, fd:]            # (TB, F1)     first-order terms

    # first-order linear term: sum over the F1 first-order fields
    lin = jnp.sum(xl, axis=1, keepdims=True)                      # (TB, 1)

    # second-order term: 0.5 * sum_d[(sum_f v_fd)^2 - sum_f v_fd^2]
    ssq = jnp.sum(x2 * x2, axis=1, keepdims=True)                 # (TB, 1)
    if fd % 128 == 0:
        # Cyclic lane rotations by multiples of `emb` put S_d = sum_f v_fd in
        # every lane (f, d); full-width vregs on the XLU slot, no 32-lane
        # slice shuffles.  sum_lanes(x2 * S) == sum_d S_d^2.
        s = x2
        for f in range(1, num_fields):
            s = s + pltpu.roll(x2, shift=f * emb, axis=1)
        sq = jnp.sum(x2 * s, axis=1, keepdims=True)               # (TB, 1)
    else:
        # Fallback for lane widths that are not vreg multiples.
        fs = x2[:, 0:emb]
        for f in range(1, num_fields):
            fs = fs + x2[:, f * emb:(f + 1) * emb]
        sq = jnp.sum(fs * fs, axis=1, keepdims=True)              # (TB, 1)

    out_ref[...] = bias_ref[0, 0] + lin + 0.5 * (sq - ssq)


def fm_forward(bias, first_embeddings, second_embeddings, *, max_block_rows=4096):
    """bias: (1,) f32; first: (B, F1) f32; second: (B, F, D) f32 -> (B,) f32."""
    B, F1 = first_embeddings.shape
    _, F, D = second_embeddings.shape
    FD = F * D

    # One lane-dense slab: [second (F*D) | first (F1)].  The reshape is free
    # (contiguous); the concat fuses with upstream embedding gathers in a full
    # pipeline, and gives the kernel a single contiguous input stream.
    slab = jnp.concatenate(
        [second_embeddings.reshape(B, FD).astype(jnp.float32),
         first_embeddings.astype(jnp.float32)],
        axis=1)                                                    # (B, FD+F1)

    # Batch tile: big (HBM-streaming kernel -> amortize the ~0.35us fixed
    # per-step overhead), multiple of 8 sublanes, and capped at ceil(B/2)
    # rounded up so the grid keeps >= 2 parallel tiles for v7x's 2 TCs.
    TB = max(8, min(max_block_rows, _round_up(pl.cdiv(B, 2), 8)))
    grid = pl.cdiv(B, TB)   # ragged last block allowed: rows are independent.

    kernel = functools.partial(fm_kernel, num_fields=F, emb=D)

    out = pl.pallas_call(
        kernel,
        out_shape=jax.ShapeDtypeStruct((B, 1), jnp.float32),
        grid_spec=pltpu.PrefetchScalarGridSpec(
            num_scalar_prefetch=0,
            grid=(grid,),
            in_specs=[
                # bias as a scalar in SMEM (one sld; no padded VMEM tile / DMA)
                pl.BlockSpec(memory_space=pltpu.MemorySpace.SMEM),
                # fused lane-dense slab (last dim == full array dim)
                pl.BlockSpec((TB, FD + F1), lambda i: (i, 0)),
            ],
            out_specs=pl.BlockSpec((TB, 1), lambda i: (i, 0)),
        ),
        compiler_params=pltpu.CompilerParams(
            dimension_semantics=("parallel",),      # shards tiles on v7x's 2 TCs
            vmem_limit_bytes=32 * 1024 * 1024,      # TB<=4096 stays well under
        ),
    )(bias.reshape(1, 1).astype(jnp.float32), slab)

    return out[:, 0]


# ------------------------- parameter init (glue) -----------------------------
def xavier_normal(key, shape):
    fan_in, fan_out = shape[0], shape[1]
    std = math.sqrt(2.0 / (fan_in + fan_out))
    return std * jax.random.normal(key, shape, dtype=jnp.float32)


def init_params(key, n_users, n_items, u_feat, i_feat, emb):
    ks = jax.random.split(key, 8)
    return {
        "first_user_embedding": xavier_normal(ks[0], (n_users, 1)),
        "first_item_embedding": xavier_normal(ks[1], (n_items, 1)),
        "user_W": xavier_normal(ks[2], (u_feat, 1)),
        "item_W": xavier_normal(ks[3], (i_feat, 1)),
        "second_user_embedding": xavier_normal(ks[4], (n_users, emb)),
        "second_item_embedding": xavier_normal(ks[5], (n_items, emb)),
        "user_V": xavier_normal(ks[6], (u_feat, emb)),
        "item_V": xavier_normal(ks[7], (i_feat, emb)),
        "bias": jnp.zeros((1,), dtype=jnp.float32),
    }


def get_first_embedding(p, user, item, user_feat_mat, item_feat_mat):
    user_feat_emb = user_feat_mat @ p["user_W"]   # (n_users, 1)
    item_feat_emb = item_feat_mat @ p["item_W"]   # (n_items, 1)
    return jnp.concatenate(
        [p["first_user_embedding"][user],
         p["first_item_embedding"][item],
         user_feat_emb[user],
         item_feat_emb[item]], axis=1)            # (B, 4)


def get_second_embedding(p, user, item, user_feat_mat, item_feat_mat):
    user_feat_emb = user_feat_mat @ p["user_V"]   # (n_users, emb)
    item_feat_emb = item_feat_mat @ p["item_V"]   # (n_items, emb)
    return jnp.stack(
        [p["second_user_embedding"][user],
         p["second_item_embedding"][item],
         user_feat_emb[user],
         item_feat_emb[item]], axis=1)            # (B, 4, emb)


# --------------------------------- main --------------------------------------
if __name__ == "__main__":
    n_users, n_items = 10, 12
    u_feat, i_feat = 6, 5
    emb_size = 32
    batch = 24          # non-divisible by the chosen tile -> exercises cdiv grid

    root = jax.random.PRNGKey(0)
    k_params, k_uf, k_if, k_u, k_i = jax.random.split(root, 5)

    params = init_params(k_params, n_users, n_items, u_feat, i_feat, emb_size)

    user_feat_mat = jax.random.normal(k_uf, (n_users, u_feat), dtype=jnp.float32)
    item_feat_mat = jax.random.normal(k_if, (n_items, i_feat), dtype=jnp.float32)
    user = jax.random.randint(k_u, (batch,), 0, n_users)
    item = jax.random.randint(k_i, (batch,), 0, n_items)

    first_embeddings = get_first_embedding(params, user, item,
                                           user_feat_mat, item_feat_mat)
    second_embeddings = get_second_embedding(params, user, item,
                                             user_feat_mat, item_feat_mat)

    out = fm_forward(params["bias"], first_embeddings, second_embeddings)
    out = jax.block_until_ready(out)

    # Pure-JAX reference (same math as PyTorch forward)
    lin_ref = jnp.sum(first_embeddings, axis=1)
    sos = jnp.sum(second_embeddings, axis=1) ** 2
    ssq = jnp.sum(second_embeddings ** 2, axis=1)
    ref = params["bias"][0] + lin_ref + 0.5 * jnp.sum(sos - ssq, axis=1)

    assert out.shape == (batch,)
    assert jnp.allclose(out, ref, atol=1e-4, rtol=1e-4), (out, ref)

    print("KERNEL_OK")
</pallas_src>

<mosaic_0001>
module attributes {stable_mosaic.version = 11 : i64} {
  func.func @fm_kernel(%arg0: i32, %arg1: memref<1x1xf32, #tpu.memory_space<smem>>, %arg2: memref<16x132xf32, #tpu.memory_space<vmem>>, %arg3: memref<16x1xf32, #tpu.memory_space<vmem>>) attributes {dimension_semantics = [#tpu.dimension_semantics<parallel>], iteration_bounds = array<i64: 2>, scalar_prefetch = 0 : i64, scratch_operands = 0 : i64, tpu.core_type = #tpu.core_type<tc>, window_params = [{transform_indices = @transform_0, window_bounds = array<i64: 1, 1>}, {transform_indices = @transform_1, window_bounds = array<i64: 16, 132>}, {transform_indices = @transform_2, window_bounds = array<i64: 16, 1>}]} {
    %c0 = arith.constant 0 : index
    %c0_0 = arith.constant 0 : index
    %0 = vector.load %arg2[%c0, %c0_0] : memref<16x132xf32, #tpu.memory_space<vmem>>, vector<16x128xf32>
    %c0_1 = arith.constant 0 : index
    %c128 = arith.constant 128 : index
    %1 = vector.load %arg2[%c0_1, %c128] : memref<16x132xf32, #tpu.memory_space<vmem>>, vector<16x4xf32>
    %cst = arith.constant dense<0.000000e+00> : vector<16xf32>
    %2 = vector.multi_reduction <add>, %1, %cst [1] : vector<16x4xf32> to vector<16xf32>
    %3 = vector.shape_cast %2 : vector<16xf32> to vector<16x1xf32>
    %4 = arith.mulf %0, %0 : vector<16x128xf32>
    %cst_2 = arith.constant dense<0.000000e+00> : vector<16xf32>
    %5 = vector.multi_reduction <add>, %4, %cst_2 [1] : vector<16x128xf32> to vector<16xf32>
    %6 = vector.shape_cast %5 : vector<16xf32> to vector<16x1xf32>
    %c32_i32 = arith.constant 32 : i32
    %7 = tpu.dynamic_rotate %0 by %c32_i32 dim 1 : vector<16x128xf32>, i32 -> vector<16x128xf32>
    %8 = arith.addf %0, %7 : vector<16x128xf32>
    %c64_i32 = arith.constant 64 : i32
    %9 = tpu.dynamic_rotate %0 by %c64_i32 dim 1 : vector<16x128xf32>, i32 -> vector<16x128xf32>
    %10 = arith.addf %8, %9 : vector<16x128xf32>
    %c96_i32 = arith.constant 96 : i32
    %11 = tpu.dynamic_rotate %0 by %c96_i32 dim 1 : vector<16x128xf32>, i32 -> vector<16x128xf32>
    %12 = arith.addf %10, %11 : vector<16x128xf32>
    %13 = arith.mulf %0, %12 : vector<16x128xf32>
    %cst_3 = arith.constant dense<0.000000e+00> : vector<16xf32>
    %14 = vector.multi_reduction <add>, %13, %cst_3 [1] : vector<16x128xf32> to vector<16xf32>
    %15 = vector.shape_cast %14 : vector<16xf32> to vector<16x1xf32>
    %c0_4 = arith.constant 0 : index
    %c0_5 = arith.constant 0 : index
    %16 = memref.load %arg1[%c0_4, %c0_5] : memref<1x1xf32, #tpu.memory_space<smem>>
    %17 = vector.broadcast %16 : f32 to vector<16x1xf32>
    %18 = arith.addf %17, %3 : vector<16x1xf32>
    %19 = arith.subf %15, %6 : vector<16x1xf32>
    %cst_6 = arith.constant 5.000000e-01 : f32
    %20 = vector.broadcast %cst_6 : f32 to vector<16x1xf32>
    %21 = arith.mulf %20, %19 : vector<16x1xf32>
    %22 = arith.addf %18, %21 : vector<16x1xf32>
    %c0_7 = arith.constant 0 : index
    %c0_8 = arith.constant 0 : index
    %23 = vector.load %arg3[%c0_7, %c0_8] : memref<16x1xf32, #tpu.memory_space<vmem>>, vector<16x1xf32>
    tpu.vector_store %arg3[%c0_7, %c0_8], %22 {strides = array<i32>} : memref<16x1xf32, #tpu.memory_space<vmem>>, vector<16x1xf32>,
    return
  }
  func.func @transform_0(%arg0: i32) -> (i32, i32) {
    %c0_i32 = arith.constant 0 : i32
    %c0_i32_0 = arith.constant 0 : i32
    %c0_i32_1 = arith.constant 0 : i32
    return %c0_i32, %c0_i32_0 : i32, i32
  }
  func.func @transform_1(%arg0: i32) -> (i32, i32) {
    %c0_i32 = arith.constant 0 : i32
    %c0_i32_0 = arith.constant 0 : i32
    return %arg0, %c0_i32 : i32, i32
  }
  func.func @transform_2(%arg0: i32) -> (i32, i32) {
    %c0_i32 = arith.constant 0 : i32
    %c0_i32_0 = arith.constant 0 : i32
    return %arg0, %c0_i32 : i32, i32
  }
}

</mosaic_0001>

<llo_original>
// kernel: tpu_custom_call.1
$region0: #{tpu_custom_call.1}
  #allocation0 [shape = 'u32[]', space=smem, size = 0x4, offset = 0x4, fixed_abs, tag = 'smem constant byte address 0x4 - core index']
  #allocation1 [shape = 'u32[144,128]{1,0:T(1,128)}', space=vmem, size = 0x12000, scoped, tag = 'internal scratch']
  #allocation2 [shape = 'f32[1,1]{1,0:T(1,128)S(6)}', space=smem, size = 0x200, scoped, tag = 'scoped memory for tpu_custom_call.1']
  %s0 = inlined_call_operand.<no memory space> [shape: f32[1,1], index: 0, kind: input, shape index: {}]
  %s1 = inlined_call_operand.hbm [shape: f32[24,132], index: 1, kind: input, shape index: {}]
  %s2 = inlined_call_operand.vmem [shape: f32[24,1], index: 2, kind: output, shape index: {}]
  %s3 = sld [smem:[#allocation0]]
  $region93: #{tpu_custom_call.1} parent=0
    _
  %s5 = ssub.s32 1, %s3
  %s6 = scalar_select 0, %s5, %s3
  %7 = sst [smem:[#allocation2]] %s0
  $region1: #{tpu_custom_call.1} parent=0
    #allocation3 [shape = 'u8[32768]{0}', space=vmem, size = 0x8000, scoped, tag = 'input window, operand 1']
    #allocation4 [shape = 's32[2]{0}', space=sflag, size = 0x8, scoped, tag = 'scoped memory for tpu_custom_call.1']
    #allocation5 [shape = 'u8[16384]{0}', space=vmem, size = 0x4000, scoped, tag = 'output window, operand 0']
    %8 = vsyncpa [#allocation4], 0
    %s9 = scalar_lea.sflag [#allocation4], 1
    %10 = vsyncpa %s9, 0
    loop: start=0, step=1, limit=4
    $region2: #{tpu_custom_call.1} parent=1 // loop_pre_header
      _
    $region3: #{tpu_custom_call.1} parent=1 // loop_header
      %s12 = sphi 0, %s16
      %p13 = scmp.ge.s32.totalorder %s12, 4
      %s20 = sphi 0, %s20
      %s22 = sphi 0, %s20
      %s23 = sphi 0, %s22
      %s37 = sphi 0, %s23
      %s43 = sphi 0, %s45
      %s46 = sphi 0, %s43
      %s47 = sphi 0, %s46
      %s63 = sphi 0, %s47
      %s69 = sphi 0, %s71
      %s72 = sphi 0, %s69
      %s73 = sphi 0, %s72
      %s89 = sphi 0, %s73
    $region4: #{tpu_custom_call.1} parent=1 // loop_header_branch
      %15 = sbr.rel (%p13) target = $region8
    $region5: #{tpu_custom_call.1} parent=1 // loop_body
      %s17 = ssub.s32 %s12, 1
      %s18 = ssub.s32 %s12, 2
      %s19 = sadd.s32 %s12, 1
      %s21 = sadd.s32 %s20, 1
      %p24 = scmp.eq.s32.totalorder %s12, 1
      %p25 = scmp.ne.s32.totalorder %s20, %s22
      %p26 = scmp.eq.s32.totalorder %s12, 0
      %p27 = por %p25, %p26
      %p28 = scmp.ne.s32.totalorder %s20, %s22
      %p29 = scmp.eq.s32.totalorder %s17, 1
      %p30 = por %p28, %p29
      %p31 = scmp.ne.s32.totalorder %s22, %s23
      %p32 = scmp.eq.s32.totalorder %s17, 0
      %p33 = por %p31, %p32
      %p34 = scmp.ne.s32.totalorder %s22, %s23
      %p35 = scmp.eq.s32.totalorder %s18, 1
      %p36 = por %p34, %p35
      %p38 = scmp.ne.s32.totalorder %s23, %s37
      %p39 = scmp.eq.s32.totalorder %s18, 0
      %p40 = por %p38, %p39
      %s41 = ssub.s32 %s12, %s19
      %p42 = scmp.eq.s32.totalorder %s41, 0
      %s44 = sadd.s32 %s43, 1
      %s45 = scalar_select %p42, %s43, %s44
      %p48 = pneg %p42
      %p49 = scmp.eq.s32.totalorder %s12, 1
      %p50 = por %p48, %p49
      %p51 = scmp.ne.s32.totalorder %s43, %s46
      %p52 = scmp.eq.s32.totalorder %s12, 0
      %p53 = por %p51, %p52
      %p54 = scmp.ne.s32.totalorder %s43, %s46
      %p55 = scmp.eq.s32.totalorder %s17, 1
      %p56 = por %p54, %p55
      %p57 = scmp.ne.s32.totalorder %s46, %s47
      %p58 = scmp.eq.s32.totalorder %s17, 0
      %p59 = por %p57, %p58
      %p60 = scmp.ne.s32.totalorder %s46, %s47
      %p61 = scmp.eq.s32.totalorder %s18, 1
      %p62 = por %p60, %p61
      %p64 = scmp.ne.s32.totalorder %s47, %s63
      %p65 = scmp.eq.s32.totalorder %s18, 0
      %p66 = por %p64, %p65
      %s67 = ssub.s32 %s12, %s19
      %p68 = scmp.eq.s32.totalorder %s67, 0
      %s70 = sadd.s32 %s69, 1
      %s71 = scalar_select %p68, %s69, %s70
      %p74 = pneg %p68
      %p75 = scmp.eq.s32.totalorder %s12, 1
      %p76 = por %p74, %p75
      %p77 = scmp.ne.s32.totalorder %s69, %s72
      %p78 = scmp.eq.s32.totalorder %s12, 0
      %p79 = por %p77, %p78
      %p80 = scmp.ne.s32.totalorder %s69, %s72
      %p81 = scmp.eq.s32.totalorder %s17, 1
      %p82 = por %p80, %p81
      %p83 = scmp.ne.s32.totalorder %s72, %s73
      %p84 = scmp.eq.s32.totalorder %s17, 0
      %p85 = por %p83, %p84
      %p86 = scmp.ne.s32.totalorder %s72, %s73
      %p87 = scmp.eq.s32.totalorder %s18, 1
      %p88 = por %p86, %p87
      %p90 = scmp.ne.s32.totalorder %s73, %s89
      %p91 = scmp.eq.s32.totalorder %s18, 0
      %p92 = por %p90, %p91
      %p93 = scmp.le.s32.totalorder 1, %s12
      %p94 = scmp.lt.s32.totalorder %s12, 3
      %p95 = pnand %p93, %p94
      %p96 = pneg %p95
      // Predicated region
      $region9: #{tpu_custom_call.1} parent=5 // pred_check
        _
      $region10: #{tpu_custom_call.1} parent=5 // pred_check_branch
        %98 = sbr.rel (%p95) target = $region12
      $region11: #{tpu_custom_call.1} parent=5 // pred_region
        %s99 = ssub.s32 %s12, 1
        // Predicated region
        $region13: #{tpu_custom_call.1} parent=11 // pred_check
          %p100 = pneg %p33
        $region14: #{tpu_custom_call.1} parent=11 // pred_check_branch
          %102 = sbr.rel (%p100) target = $region16
        $region15: #{tpu_custom_call.1} parent=11 // pred_region
          _
        $region16: #{tpu_custom_call.1} parent=11 // pred_fallthru
          _
      $region12: #{tpu_custom_call.1} parent=5 // pred_fallthru
        _
      %p103 = scmp.lt.s32.totalorder %s12, 2
      // Predicated region
      $region17: #{tpu_custom_call.1} parent=5 // pred_check
        %p104 = pneg %p103
      $region18: #{tpu_custom_call.1} parent=5 // pred_check_branch
        %106 = sbr.rel (%p104) target = $region20
      $region19: #{tpu_custom_call.1} parent=5 // pred_region
        // Predicated region
        $region21: #{tpu_custom_call.1} parent=19 // pred_check
          %p107 = pneg %p53
        $region22: #{tpu_custom_call.1} parent=19 // pred_check_branch
          %109 = sbr.rel (%p107) target = $region24
        $region23: #{tpu_custom_call.1} parent=19 // pred_region
          %s110 = sand.u32 %s43, 1
          %s111 = scalar_lea.sflag [#allocation4], %s110
          %s112 = sand.u32 %s43, 1
          %s113 = smul.addr %s112, 32
          %s114 = scalar_lea.vmem [#allocation3], %s113
          %s115 = smul.u32 2, %s12
          %s116 = ssub.s32 3, %s115
          %p117 = scmp.lt.s32.totalorder %s116, 2
          %s118 = scalar_select %p117, %s116, 2
          %s119 = smul.u32 128, %s118
          %s120 = smul.u32 %s119, 2
          %s122 = ssub.s32 512, %s120
          %123 = vsyncadd %s111, %s122
          %p124 = scmp.ne.s32.totalorder 0, %s120
          %s125 = smul.addr %s115, 2
          %s126 = smul.addr %s125, 128
          %s127 = scalar_lea.hbm %s1, %s126
          %s128 = smul.u32 16, %s118
          %s129 = sshll.u32 %s114, 4
          %s130 = int_to_ptr.vmem [resolvable:$true] %s129
          %s131 = sshll.u32 %s128, 4
          %135 = dma.hbm_to_vmem [thread:$0]  (%p124), %s127, %s131, %s130, %s111, 256, 256, 16
        $region24: #{tpu_custom_call.1} parent=19 // pred_fallthru
          _
      $region20: #{tpu_custom_call.1} parent=5 // pred_fallthru
        _
      %p136 = scmp.le.s32.totalorder 1, %s12
      %p137 = scmp.lt.s32.totalorder %s12, 3
      %p138 = pnand %p136, %p137
      %p139 = pneg %p138
      // Predicated region
      $region25: #{tpu_custom_call.1} parent=5 // pred_check
        _
      $region26: #{tpu_custom_call.1} parent=5 // pred_check_branch
        %141 = sbr.rel (%p138) target = $region28
      $region27: #{tpu_custom_call.1} parent=5 // pred_region
        %s142 = ssub.s32 %s12, 1
        %s143 = sand.u32 %s46, 1
        %s144 = scalar_lea.sflag [#allocation4], %s143
        %s145 = sand.u32 %s46, 1
        %s146 = smul.addr %s145, 32
        %s147 = scalar_lea.vmem [#allocation3], %s146
        // Predicated region
        $region29: #{tpu_custom_call.1} parent=27 // pred_check
          %p148 = pneg %p59
        $region30: #{tpu_custom_call.1} parent=27 // pred_check_branch
          %150 = sbr.rel (%p148) target = $region32
        $region31: #{tpu_custom_call.1} parent=27 // pred_region
          %151 = dma.done %s144, 512
        $region32: #{tpu_custom_call.1} parent=27 // pred_fallthru
          _
        %p152 = pneg %p33
        %p153 = pneg %p30
        %s154 = sand.u32 %s46, 1
        %s155 = scalar_lea.sflag [#allocation4], %s154
        %s156 = sand.u32 %s46, 1
        %s157 = smul.addr %s156, 32
        %s158 = scalar_lea.vmem [#allocation3], %s157
        %p159 = pneg %p59
        %p160 = pneg %p56
        %p161 = pneg %p85
        %p162 = pneg %p82
        %s163 = sand.u32 %s72, 1
        %s164 = sand.u32 %s72, 1
        %s165 = smul.addr %s164, 16
        %s166 = scalar_lea.vmem [#allocation5], %s165
        %s167 = smul.u32 2, %s17
        %s168 = ssub.s32 3, %s167
        %p169 = scmp.lt.s32.totalorder %s168, 2
        %s170 = scalar_select %p169, %s168, 2
        %s171 = smul.u32 128, %s170
        %s172 = smul.u32 %s171, 2
        %s173 = smul.u32 2, %s17
        %s174 = ssub.s32 3, %s173
        %p175 = scmp.lt.s32.totalorder %s174, 2
        %s176 = scalar_select %p175, %s174, 2
        %s177 = smul.u32 128, %s176
        %v178 = vld [vmem:[%s147] sm:$0xff]
        %v179 = vld [vmem:[%s147 + $0x10] sm:$0xff]
        %v180 = vld [vmem:[%s147 + $0x8] sm:$0xff]
        %v181 = vld [vmem:[%s147 + $0x18] sm:$0xff]
        %vm182 = vcmask 31744
        %v183 = vsel %vm182, %v180, 0.0
        %184 = vadd.xlane.f32.xlu0 %v183
        %v185 = vpop.xlane.xlu0 %184
        %v186 = vsel %vm182, %v181, 0.0
        %187 = vadd.xlane.f32.xlu0 %v186
        %v188 = vpop.xlane.xlu0 %187
        %v189 = vmul.f32 %v178, %v178
        %v190 = vmul.f32 %v179, %v179
        %191 = vadd.xlane.f32.xlu0 %v189
        %v192 = vpop.xlane.xlu0 %191
        %193 = vadd.xlane.f32.xlu0 %v190
        %v194 = vpop.xlane.xlu0 %193
        %195 = vrot.lane.b32.xlu0 %v178, 32
        %v196 = vpop.permute.xlu0 %195
        %197 = vrot.lane.b32.xlu0 %v179, 32
        %v198 = vpop.permute.xlu0 %197
        %v199 = vadd.f32 %v178, %v196
        %v200 = vadd.f32 %v179, %v198
        %201 = vrot.lane.b32.xlu0 %v178, 64
        %v202 = vpop.permute.xlu0 %201
        %203 = vrot.lane.b32.xlu0 %v179, 64
        %v204 = vpop.permute.xlu0 %203
        %v205 = vadd.f32 %v199, %v202
        %v206 = vadd.f32 %v200, %v204
        %207 = vrot.lane.b32.xlu0 %v178, 96
        %v208 = vpop.permute.xlu0 %207
        %209 = vrot.lane.b32.xlu0 %v179, 96
        %v210 = vpop.permute.xlu0 %209
        %v211 = vadd.f32 %v205, %v208
        %v212 = vadd.f32 %v206, %v210
        %v213 = vmul.f32 %v178, %v211
        %v214 = vmul.f32 %v179, %v212
        %215 = vadd.xlane.f32.xlu0 %v213
        %v216 = vpop.xlane.xlu0 %215
        %217 = vadd.xlane.f32.xlu0 %v214
        %v218 = vpop.xlane.xlu0 %217
        %s219 = sld [smem:[#allocation2]]
        %v220 = vstv %s219
        %v221 = vadd.f32 %v220, %v185
        %v222 = vadd.f32 %v220, %v188
        %v223 = vsub.f32 %v216, %v192
        %v224 = vsub.f32 %v218, %v194
        %v225 = vmul.f32 %v223, 0.5
        %v226 = vmul.f32 %v224, 0.5
        %v227 = vadd.f32 %v221, %v225
        %v228 = vadd.f32 %v222, %v226
        %vm229 = vcmask 7168
        %230 = vst.msk [vmem:[%s166] sm:$0xff] %vm229, %v227
        %231 = vst.msk [vmem:[%s166 + $0x8] sm:$0xff] %vm229, %v228
        %s232 = sand.u32 %s72, 1
        %s233 = sand.u32 %s72, 1
        %s234 = smul.addr %s233, 16
        %s235 = scalar_lea.vmem [#allocation5], %s234
        // Predicated region
        $region33: #{tpu_custom_call.1} parent=27 // pred_check
          %p236 = pneg %p82
        $region34: #{tpu_custom_call.1} parent=27 // pred_check_branch
          %238 = sbr.rel (%p236) target = $region36
        $region35: #{tpu_custom_call.1} parent=27 // pred_region
          %s239 = smul.u32 2, %s17
          %s240 = ssub.s32 3, %s239
          %p241 = scmp.lt.s32.totalorder %s240, 2
          %s242 = scalar_select %p241, %s240, 2
          %s243 = smul.u32 128, %s242
          %p244 = scmp.ne.s32.totalorder 0, %s243
          %s245 = smul.addr %s239, 8
          %s246 = scalar_lea.vmem %s2, %s245
          // Predicated region
          $region37: #{tpu_custom_call.1} parent=35 // pred_check
            %p247 = pneg %p244
          $region38: #{tpu_custom_call.1} parent=35 // pred_check_branch
            %249 = sbr.rel (%p247) target = $region40
          $region39: #{tpu_custom_call.1} parent=35 // pred_region
            // Predicated region
            $region41: #{tpu_custom_call.1} parent=39 // pred_check
              _
            $region42: #{tpu_custom_call.1} parent=39 // pred_check_branch
              %251 = sbr.rel (0) target = $region44
            $region43: #{tpu_custom_call.1} parent=39 // pred_region
              // Predicated region
              $region63: #{tpu_custom_call.1} parent=43 // pred_check
                _
              $region64: #{tpu_custom_call.1} parent=43 // pred_check_branch
                %303 = sbr.rel (0) target = $region66
              $region65: #{tpu_custom_call.1} parent=43 // pred_region
                %s304 = sshrl.u32 %s242, 1
                // While loop
                $region67: #{tpu_custom_call.1} parent=65 // loop_pre_header
                  _
                $region68: #{tpu_custom_call.1} parent=65 // loop_header
                  %s306 = sphi 0, %s308
                  %p307 = scmp.ge.s32.totalorder %s306, %s304
                  %s311 = sphi 0, %s320
                  %s312 = sphi %s235, %s323
                  %s313 = sphi %s246, %s324
                $region69: #{tpu_custom_call.1} parent=65 // loop_header_branch
                  %310 = sbr.rel (%p307) target = $region73
                $region70: #{tpu_custom_call.1} parent=65 // loop_body
                  %v314 = vld [vmem:[%s312] sm:$0xff]
                  %315 = vst [vmem:[%s313] sm:$0xff] %v314
                  %v316 = vld [vmem:[%s312 + $0x8] sm:$0xff]
                  %317 = vst [vmem:[%s313 + $0x8] sm:$0xff] %v316
                  %s318 = sadd.s32 1, %s311
                  %p319 = scmp.ge.s32.totalorder %s318, %s304
                  %s320 = scalar_select %p319, 0, %s318
                  %s321 = smul.u32 %s320, 16
                  %s322 = smul.u32 %s320, 16
                  %s323 = scalar_lea.vmem %s235, %s321 [#allocation5]
                  %s324 = scalar_lea.vmem %s246, %s322
                $region71: #{tpu_custom_call.1} parent=65 // loop_footer
                  %s308 = sadd.s32 %s306, 1
                $region72: #{tpu_custom_call.1} parent=65 // loop_footer_branch
                  %305 = sbr.rel target = $region68
                $region73: #{tpu_custom_call.1} parent=65 // loop_exit
                  _
                %s325 = sshrl.u32 %s242, 1
                %s326 = sand.u32 %s242, 1
                %s327 = smul.u32 %s325, 2
                %s328 = smul.u32 8, %s327
                %s329 = scalar_lea.vmem %s235, %s328 [#allocation5]
                %s330 = smul.u32 8, %s327
                %s331 = scalar_lea.vmem %s246, %s330
                // While loop
                $region74: #{tpu_custom_call.1} parent=65 // loop_pre_header
                  _
                $region75: #{tpu_custom_call.1} parent=65 // loop_header
                  %s333 = sphi 0, %s335
                  %p334 = scmp.ge.s32.totalorder %s333, %s326
                  %s338 = sphi 0, %s345
                  %s339 = sphi %s329, %s348
                  %s340 = sphi %s331, %s349
                $region76: #{tpu_custom_call.1} parent=65 // loop_header_branch
                  %337 = sbr.rel (%p334) target = $region80
                $region77: #{tpu_custom_call.1} parent=65 // loop_body
                  %v341 = vld [vmem:[%s339] sm:$0xff]
                  %342 = vst [vmem:[%s340] sm:$0xff] %v341
                  %s343 = sadd.s32 1, %s338
                  %p344 = scmp.ge.s32.totalorder %s343, %s326
                  %s345 = scalar_select %p344, 0, %s343
                  %s346 = smul.u32 %s345, 8
                  %s347 = smul.u32 %s345, 8
                  %s348 = scalar_lea.vmem %s329, %s346 [#allocation5]
                  %s349 = scalar_lea.vmem %s331, %s347
                $region78: #{tpu_custom_call.1} parent=65 // loop_footer
                  %s335 = sadd.s32 %s333, 1
                $region79: #{tpu_custom_call.1} parent=65 // loop_footer_branch
                  %332 = sbr.rel target = $region75
                $region80: #{tpu_custom_call.1} parent=65 // loop_exit
                  _
              $region66: #{tpu_custom_call.1} parent=43 // pred_fallthru
                _
              // Predicated region
              $region81: #{tpu_custom_call.1} parent=43 // pred_check
                _
              $region82: #{tpu_custom_call.1} parent=43 // pred_check_branch
                %351 = sbr.rel target = $region84
              $region83: #{tpu_custom_call.1} parent=43 // pred_region
                _
              $region84: #{tpu_custom_call.1} parent=43 // pred_fallthru
                _
            $region44: #{tpu_custom_call.1} parent=39 // pred_fallthru
              _
            // Predicated region
            $region45: #{tpu_custom_call.1} parent=39 // pred_check
              _
            $region46: #{tpu_custom_call.1} parent=39 // pred_check_branch
              %253 = sbr.rel target = $region48
            $region47: #{tpu_custom_call.1} parent=39 // pred_region
              %s255 = ssub.s32 256, 1
              %s256 = sshrl.u32 %s242, 1
              // While loop
              $region49: #{tpu_custom_call.1} parent=47 // loop_pre_header
                _
              $region50: #{tpu_custom_call.1} parent=47 // loop_header
                %s258 = sphi 0, %s260
                %p259 = scmp.ge.s32.totalorder %s258, %s256
                %s263 = sphi 0, %s272
                %s264 = sphi %s235, %s275
                %s265 = sphi %s246, %s276
              $region51: #{tpu_custom_call.1} parent=47 // loop_header_branch
                %262 = sbr.rel (%p259) target = $region55
              $region52: #{tpu_custom_call.1} parent=47 // loop_body
                %v266 = vld [vmem:[%s264] sm:%s255]
                %267 = vst [vmem:[%s265] sm:%s255] %v266
                %v268 = vld [vmem:[%s264 + $0x8] sm:%s255]
                %269 = vst [vmem:[%s265 + $0x8] sm:%s255] %v268
                %s270 = sadd.s32 1, %s263
                %p271 = scmp.ge.s32.totalorder %s270, %s256
                %s272 = scalar_select %p271, 0, %s270
                %s273 = smul.u32 %s272, 16
                %s274 = smul.u32 %s272, 16
                %s275 = scalar_lea.vmem %s235, %s273 [#allocation5]
                %s276 = scalar_lea.vmem %s246, %s274
              $region53: #{tpu_custom_call.1} parent=47 // loop_footer
                %s260 = sadd.s32 %s258, 1
              $region54: #{tpu_custom_call.1} parent=47 // loop_footer_branch
                %257 = sbr.rel target = $region50
              $region55: #{tpu_custom_call.1} parent=47 // loop_exit
                _
              %s277 = sshrl.u32 %s242, 1
              %s278 = sand.u32 %s242, 1
              %s279 = smul.u32 %s277, 2
              %s280 = smul.u32 8, %s279
              %s281 = scalar_lea.vmem %s235, %s280 [#allocation5]
              %s282 = smul.u32 8, %s279
              %s283 = scalar_lea.vmem %s246, %s282
              // While loop
              $region56: #{tpu_custom_call.1} parent=47 // loop_pre_header
                _
              $region57: #{tpu_custom_call.1} parent=47 // loop_header
                %s285 = sphi 0, %s287
                %p286 = scmp.ge.s32.totalorder %s285, %s278
                %s290 = sphi 0, %s297
                %s291 = sphi %s281, %s300
                %s292 = sphi %s283, %s301
              $region58: #{tpu_custom_call.1} parent=47 // loop_header_branch
                %289 = sbr.rel (%p286) target = $region62
              $region59: #{tpu_custom_call.1} parent=47 // loop_body
                %v293 = vld [vmem:[%s291] sm:%s255]
                %294 = vst [vmem:[%s292] sm:%s255] %v293
                %s295 = sadd.s32 1, %s290
                %p296 = scmp.ge.s32.totalorder %s295, %s278
                %s297 = scalar_select %p296, 0, %s295
                %s298 = smul.u32 %s297, 8
                %s299 = smul.u32 %s297, 8
                %s300 = scalar_lea.vmem %s281, %s298 [#allocation5]
                %s301 = scalar_lea.vmem %s283, %s299
              $region60: #{tpu_custom_call.1} parent=47 // loop_footer
                %s287 = sadd.s32 %s285, 1
              $region61: #{tpu_custom_call.1} parent=47 // loop_footer_branch
                %284 = sbr.rel target = $region57
              $region62: #{tpu_custom_call.1} parent=47 // loop_exit
                _
            $region48: #{tpu_custom_call.1} parent=39 // pred_fallthru
              _
          $region40: #{tpu_custom_call.1} parent=35 // pred_fallthru
            _
          %352 = vnop
        $region36: #{tpu_custom_call.1} parent=27 // pred_fallthru
          _
      $region28: #{tpu_custom_call.1} parent=5 // pred_fallthru
        _
      %p353 = scmp.le.s32.totalorder 2, %s12
      // Predicated region
      $region85: #{tpu_custom_call.1} parent=5 // pred_check
        %p354 = pneg %p353
      $region86: #{tpu_custom_call.1} parent=5 // pred_check_branch
        %356 = sbr.rel (%p354) target = $region88
      $region87: #{tpu_custom_call.1} parent=5 // pred_region
        %s357 = ssub.s32 %s12, 2
        // Predicated region
        $region89: #{tpu_custom_call.1} parent=87 // pred_check
          %p358 = pneg %p88
        $region90: #{tpu_custom_call.1} parent=87 // pred_check_branch
          %360 = sbr.rel (%p358) target = $region92
        $region91: #{tpu_custom_call.1} parent=87 // pred_region
          %s361 = sand.u32 %s73, 1
          %s362 = sand.u32 %s73, 1
          %s363 = smul.addr %s362, 16
          %s364 = scalar_lea.vmem [#allocation5], %s363
        $region92: #{tpu_custom_call.1} parent=87 // pred_fallthru
          _
      $region88: #{tpu_custom_call.1} parent=5 // pred_fallthru
        _
    $region6: #{tpu_custom_call.1} parent=1 // loop_footer
      %s16 = sadd.s32 1, %s12
    $region7: #{tpu_custom_call.1} parent=1 // loop_footer_branch
      %11 = sbr.rel target = $region3
    $region8: #{tpu_custom_call.1} parent=1 // loop_exit
      _
    %365 = vsyncpa [#allocation4], 1
    %s366 = scalar_lea.sflag [#allocation4], 1
    %367 = vsyncpa %s366, 1

</llo_original>
